<compile_context>
chip_gen: v7x
topology: tpu7x:2x2x1
jax: 0.10.0
libtpu: 0.0.40
codegen_flags: <defaults>
</compile_context>

<pallas_src>
import functools

import jax
import jax.numpy as jnp
from jax.experimental import pallas as pl
from jax.experimental.pallas import tpu as pltpu


# ----------------------------------------------------------------------------
# Helpers
# ----------------------------------------------------------------------------
def _round_up(x, m):
    return (x + m - 1) // m * m


def _largest_divisor_tile(total, quantum, cap):
    """Largest multiple of `quantum` that divides `total` and is <= cap."""
    t = min(total, cap)
    t = (t // quantum) * quantum
    while t >= quantum:
        if total % t == 0:
            return t
        t -= quantum
    return total


def _default_vmem_limit():
    # v5e / v6e have 128 MiB VMEM per TensorCore, v7x only 64 MiB.  Request
    # ~3/4 of physical capacity so double buffers + compiler scratch fit.
    try:
        cap = pltpu.get_tpu_info().vmem_capacity_bytes
    except Exception:
        cap = 64 << 20
    return int(min(cap * 3 // 4, 96 << 20))


_VMEM_LIMIT = _default_vmem_limit()


# ----------------------------------------------------------------------------
# Pallas kernel 1: tiled matmul + bias + activation (used for the 1x1 conv)
# ----------------------------------------------------------------------------
def _matmul_bias_act_kernel(x_ref, w_ref, b_ref, o_ref, acc_ref, *, act):
    @pl.when(pl.program_id(2) == 0)
    def _():
        acc_ref[...] = jnp.zeros_like(acc_ref)

    acc_ref[...] += jnp.dot(x_ref[...], w_ref[...],
                            preferred_element_type=jnp.float32)

    @pl.when(pl.program_id(2) == pl.num_programs(2) - 1)
    def _():
        y = acc_ref[...] + b_ref[...]
        if act == "relu":
            y = jnp.maximum(y, 0.0)
        elif act == "clamp01":
            y = jnp.clip(y, 0.0, 1.0)
        o_ref[...] = y.astype(o_ref.dtype)


def conv2d_1x1_bias_act(x_nhwc, w_oihw, b, act, out_dtype=jnp.bfloat16):
    """1x1 conv as an (M, K) x (K, Coutp) matmul with bf16 inputs, f32 acc."""
    N, H, W, C = x_nhwc.shape
    Cout = w_oihw.shape[0]
    Coutp = _round_up(Cout, 128)
    M = N * H * W

    xm = x_nhwc.astype(jnp.bfloat16).reshape(M, C)
    wm = w_oihw.reshape(Cout, C).T                      # (Cin, Cout)
    if Coutp != Cout:
        wm = jnp.pad(wm, ((0, 0), (0, Coutp - Cout)))
    wm = wm.astype(jnp.bfloat16)
    bm = jnp.pad(b, (0, Coutp - Cout)).astype(jnp.float32).reshape(1, Coutp)

    TN = 256 if Coutp % 256 == 0 else 128
    TK = _largest_divisor_tile(C, 128, 1024)
    TM = M
    for cand in (512, 256, 128, 64, 32, 16, 8):
        if M > cand and M % cand == 0:
            TM = cand
            break
    grid = (M // TM, Coutp // TN, C // TK)

    out = pl.pallas_call(
        functools.partial(_matmul_bias_act_kernel, act=act),
        out_shape=jax.ShapeDtypeStruct((M, Coutp), out_dtype),
        grid_spec=pltpu.PrefetchScalarGridSpec(
            num_scalar_prefetch=0,
            grid=grid,
            in_specs=[
                pl.BlockSpec((TM, TK), lambda m, n, k: (m, k)),
                pl.BlockSpec((TK, TN), lambda m, n, k: (k, n)),
                pl.BlockSpec((1, TN), lambda m, n, k: (0, n)),
            ],
            out_specs=pl.BlockSpec((TM, TN), lambda m, n, k: (m, n)),
            scratch_shapes=[pltpu.VMEM((TM, TN), jnp.float32)],
        ),
        compiler_params=pltpu.CompilerParams(
            dimension_semantics=("parallel", "parallel", "arbitrary"),
            vmem_limit_bytes=_VMEM_LIMIT,
        ),
    )(xm, wm, bm)
    out = out.reshape(N, H, W, Coutp)
    return out if Coutp == Cout else out[..., :Cout]


# ----------------------------------------------------------------------------
# Pallas kernel 2: 5x5 "same" conv via in-kernel 25-tap accumulation
# ----------------------------------------------------------------------------
def _conv5x5_kernel(xa_ref, xb_ref, w_ref, b_ref, o_ref, x2_ref, acc_ref,
                    *, Wp, TH, halo, act):
    """xa: (1, TH*Wp, C) rows of the padded input (flattened rows x cols),
    xb: (1, halo*Wp, C) the halo rows below, w: (25, C, TN), b: (1, TN),
    o: (1, TH*Wp, TN) output in the padded-width domain."""
    M = TH * Wp
    Mh = halo * Wp
    C = x2_ref.shape[1]

    # Assemble (TH + halo) * Wp contiguous padded rows (+8 slack rows) in VMEM.
    x2_ref[0:M, :] = xa_ref[0]
    x2_ref[M:M + Mh, :] = xb_ref[0]
    x2_ref[M + Mh:M + Mh + 8, :] = jnp.zeros((8, C), x2_ref.dtype)

    acc_ref[...] = jnp.zeros_like(acc_ref)
    # 25 taps: output pixel (t, w) <- padded[(t + i), (w + j)], i.e. a shifted
    # window of the flat (row*Wp + col) matrix.  Each tap is one MXU matmul.
    for i in range(5):
        for j in range(5):
            off = i * Wp + j
            acc_ref[...] += jnp.dot(x2_ref[off:off + M, :], w_ref[i * 5 + j],
                                    preferred_element_type=jnp.float32)

    y = acc_ref[...] + b_ref[...]
    if act == "relu":
        y = jnp.maximum(y, 0.0)
    elif act == "clamp01":
        y = jnp.clip(y, 0.0, 1.0)
    o_ref[0] = y.astype(o_ref.dtype)


def conv2d_5x5_bias_act(x_nhwc, w_oihw, b, act, out_dtype=jnp.bfloat16):
    """5x5 conv, padding=2, bias + activation fused.  NHWC in / NHWC out."""
    N, H, W, C = x_nhwc.shape
    Cout = w_oihw.shape[0]
    Coutp = _round_up(Cout, 128)
    TN = 256 if Coutp % 256 == 0 else 128
    NN = Coutp // TN

    Wp = W + 4
    # q keeps every row-block size a multiple of 8 sublanes.
    q = 4 if Wp % 2 == 0 else 8
    halo = q
    Hq = max(q, _round_up(H, q))
    TH = q
    while Hq % (TH * 2) == 0 and (TH * 2) * Wp <= 1024:
        TH *= 2
    R = Hq // TH
    M = TH * Wp
    step_b = TH // halo

    # Zero-pad: 2 rows on top, enough rows on the bottom so every halo block
    # is in-bounds; 2 cols left/right.  Extra zero rows never contribute.
    xp = jnp.pad(x_nhwc.astype(jnp.bfloat16),
                 ((0, 0), (2, Hq - H + TH - 2), (2, 2), (0, 0)))
    xflat = xp.reshape(N, (Hq + TH) * Wp, C)

    wt = jnp.transpose(w_oihw, (2, 3, 1, 0)).reshape(25, C, Cout)
    if Coutp != Cout:
        wt = jnp.pad(wt, ((0, 0), (0, 0), (0, Coutp - Cout)))
    wt = wt.astype(jnp.bfloat16)
    bt = jnp.pad(b, (0, Coutp - Cout)).astype(jnp.float32).reshape(1, Coutp)

    # Grid order (Cout-tile, batch, row-tile): the weight / bias block index
    # only depends on the OUTERMOST axis, so Pallas re-DMAs the (25, C, TN)
    # weight tile just NN times total instead of once per grid step.
    out = pl.pallas_call(
        functools.partial(_conv5x5_kernel, Wp=Wp, TH=TH, halo=halo, act=act),
        out_shape=jax.ShapeDtypeStruct((N, Hq * Wp, Coutp), out_dtype),
        grid_spec=pltpu.PrefetchScalarGridSpec(
            num_scalar_prefetch=0,
            grid=(NN, N, R),
            in_specs=[
                pl.BlockSpec((1, M, C), lambda n, bb, r: (bb, r, 0)),
                pl.BlockSpec((1, halo * Wp, C),
                             lambda n, bb, r: (bb, (r + 1) * step_b, 0)),
                pl.BlockSpec((25, C, TN), lambda n, bb, r: (0, 0, n)),
                pl.BlockSpec((1, TN), lambda n, bb, r: (0, n)),
            ],
            out_specs=pl.BlockSpec((1, M, TN), lambda n, bb, r: (bb, r, n)),
            scratch_shapes=[
                pltpu.VMEM(((TH + halo) * Wp + 8, C), jnp.bfloat16),
                pltpu.VMEM((M, TN), jnp.float32),
            ],
        ),
        compiler_params=pltpu.CompilerParams(
            dimension_semantics=("arbitrary", "parallel", "parallel"),
            vmem_limit_bytes=_VMEM_LIMIT,
        ),
    )(xflat, xflat, wt, bt)

    # Drop the padded-width junk columns / padded rows / padded channels (glue).
    out = out.reshape(N, Hq, Wp, Coutp)[:, :H, :W, :Cout]
    return out


# ----------------------------------------------------------------------------
# Pallas kernel 3: MaxUnpool2d(kernel=(2,2), stride=2) with indices
# ----------------------------------------------------------------------------
def _unpool_kernel(x_ref, idx_ref, o_ref, *, shift, w_out):
    x = x_ref[0]                            # (TH, W, C)
    idx = idx_ref[0]                        # (TH, W, C) int32 flat into 2H*2W
    dc = jnp.bitwise_and(idx, 1)
    if shift is not None:                   # 2W is a power of two: shift/and
        dr = jnp.bitwise_and(jnp.right_shift(idx, shift), 1)
    else:
        dr = jnp.bitwise_and(idx // w_out, 1)
    zero = jnp.zeros_like(x)
    for a in range(2):
        for bcol in range(2):
            sel = jnp.logical_and(dr == a, dc == bcol)
            o_ref[0, :, 2 * a + bcol, :, :] = jnp.where(sel, x, zero)


def max_unpool2x2(x_nhwc, idx_nhwc):
    """x: (N,H,W,C), idx: (N,H,W,C) flat indices into (2H)*(2W) -> (N,2H,2W,C)."""
    N, H, W, C = x_nhwc.shape
    x = x_nhwc.astype(jnp.bfloat16)
    idx = idx_nhwc.astype(jnp.int32)
    w_out = 2 * W
    shift = int(w_out).bit_length() - 1 if (w_out & (w_out - 1)) == 0 else None

    TH = 1
    while H % (TH * 2) == 0 and (TH * 2) * W * C * 6 <= (2 << 20):
        TH *= 2
    R = H // TH

    out5 = pl.pallas_call(
        functools.partial(_unpool_kernel, shift=shift, w_out=w_out),
        out_shape=jax.ShapeDtypeStruct((N, H, 4, W, C), jnp.bfloat16),
        grid_spec=pltpu.PrefetchScalarGridSpec(
            num_scalar_prefetch=0,
            grid=(N, R),
            in_specs=[
                pl.BlockSpec((1, TH, W, C), lambda b, r: (b, r, 0, 0)),
                pl.BlockSpec((1, TH, W, C), lambda b, r: (b, r, 0, 0)),
            ],
            out_specs=pl.BlockSpec((1, TH, 4, W, C),
                                   lambda b, r: (b, r, 0, 0, 0)),
        ),
        compiler_params=pltpu.CompilerParams(
            dimension_semantics=("parallel", "parallel"),
            vmem_limit_bytes=_VMEM_LIMIT,
        ),
    )(x, idx)
    # (N,H,4,W,C) -> (N,H,2,2,W,C) -> (N,H,2,W,2,C) -> (N,2H,2W,C)   (glue)
    out = out5.reshape(N, H, 2, 2, W, C).transpose(0, 1, 2, 4, 3, 5)
    return out.reshape(N, 2 * H, 2 * W, C)


# ----------------------------------------------------------------------------
# DIMDecoder parameters + forward
# ----------------------------------------------------------------------------
def _conv_init(key, cout, cin, k):
    wk, bk = jax.random.split(key)
    fan_in = cin * k * k
    w = jax.random.normal(wk, (cout, cin, k, k), jnp.float32) / jnp.sqrt(fan_in)
    b = jax.random.normal(bk, (cout,), jnp.float32) * 0.01
    return w, b


def init_dim_decoder_params(key):
    ks = jax.random.split(key, 7)
    p = {}
    p["w6"], p["b6"] = _conv_init(ks[0], 512, 4096, 1)   # dconv6
    p["w5"], p["b5"] = _conv_init(ks[1], 512, 512, 5)    # dconv5
    p["w4"], p["b4"] = _conv_init(ks[2], 256, 512, 5)    # dconv4
    p["w3"], p["b3"] = _conv_init(ks[3], 128, 256, 5)    # dconv3
    p["w2"], p["b2"] = _conv_init(ks[4], 64, 128, 5)     # dconv2
    p["w1"], p["b1"] = _conv_init(ks[5], 64, 64, 5)      # dconv1
    p["wp"], p["bp"] = _conv_init(ks[6], 1, 64, 5)       # alpha_pred
    return p


def dim_decoder_forward(params, inputs, extract_feature, x=None):
    """inputs = (idx1p, idx2p, idx3p, idx4p, idx5p, x6), all NCHW like PyTorch."""
    idx1p, idx2p, idx3p, idx4p, idx5p, x6 = inputs
    to_nhwc = lambda t: jnp.transpose(t, (0, 2, 3, 1))
    to_nchw = lambda t: jnp.transpose(t, (0, 3, 1, 2))

    if extract_feature:
        x6d = conv2d_1x1_bias_act(to_nhwc(x6), params["w6"], params["b6"], "relu")
        x5d = max_unpool2x2(x6d, to_nhwc(idx5p))
        x5d = conv2d_5x5_bias_act(x5d, params["w5"], params["b5"], "relu")
        x4d = max_unpool2x2(x5d, to_nhwc(idx4p))
        x4d = conv2d_5x5_bias_act(x4d, params["w4"], params["b4"], "relu",
                                  out_dtype=jnp.float32)
        return to_nchw(x4d)
    else:
        # TODO(synk): self.fam (FeatureAggregationModule) is not defined in the
        # provided source; `x` is treated as the FAM output (N, 256, H3, W3).
        attb, attf, mask = None, None, None
        x3d = max_unpool2x2(to_nhwc(x), to_nhwc(idx3p))
        x3d = conv2d_5x5_bias_act(x3d, params["w3"], params["b3"], "relu")
        x2d = max_unpool2x2(x3d, to_nhwc(idx2p))
        x2d = conv2d_5x5_bias_act(x2d, params["w2"], params["b2"], "relu")
        x1d = max_unpool2x2(x2d, to_nhwc(idx1p))
        x1d = conv2d_5x5_bias_act(x1d, params["w1"], params["b1"], "relu")
        xpred = conv2d_5x5_bias_act(x1d, params["wp"], params["bp"], "clamp01",
                                    out_dtype=jnp.float32)
        return to_nchw(xpred), attb, attf, mask


# ----------------------------------------------------------------------------
# Pure-JAX f32 reference (for a loose numerical check) + synthetic inputs
# ----------------------------------------------------------------------------
def _ref_conv(x_nhwc, w_oihw, b, act):
    w_hwio = jnp.transpose(w_oihw, (2, 3, 1, 0))
    y = jax.lax.conv_general_dilated(
        x_nhwc, w_hwio, (1, 1), "SAME",
        dimension_numbers=("NHWC", "HWIO", "NHWC"))
    y = y + b
    if act == "relu":
        y = jnp.maximum(y, 0.0)
    elif act == "clamp01":
        y = jnp.clip(y, 0.0, 1.0)
    return y


def _ref_unpool(x_nhwc, idx_nhwc):
    N, H, W, C = x_nhwc.shape
    dr = (idx_nhwc // (2 * W)) % 2
    dc = idx_nhwc % 2
    inner = []
    for a in (0, 1):
        planes = [jnp.where((dr == a) & (dc == b), x_nhwc, 0.0) for b in (0, 1)]
        inner.append(jnp.stack(planes, axis=3))      # (N,H,W,2,C)
    out = jnp.stack(inner, axis=2)                   # (N,H,2,W,2,C)
    return out.reshape(N, 2 * H, 2 * W, C)


def _ref_forward_extract(params, inputs):
    idx1p, idx2p, idx3p, idx4p, idx5p, x6 = inputs
    t = lambda a: jnp.transpose(a, (0, 2, 3, 1))
    x6d = _ref_conv(t(x6), params["w6"], params["b6"], "relu")
    x5d = _ref_unpool(x6d, t(idx5p))
    x5d = _ref_conv(x5d, params["w5"], params["b5"], "relu")
    x4d = _ref_unpool(x5d, t(idx4p))
    x4d = _ref_conv(x4d, params["w4"], params["b4"], "relu")
    return jnp.transpose(x4d, (0, 3, 1, 2))


def _ref_forward_predict(params, inputs, x):
    idx1p, idx2p, idx3p, idx4p, idx5p, _ = inputs
    t = lambda a: jnp.transpose(a, (0, 2, 3, 1))
    x3d = _ref_unpool(t(x), t(idx3p))
    x3d = _ref_conv(x3d, params["w3"], params["b3"], "relu")
    x2d = _ref_unpool(x3d, t(idx2p))
    x2d = _ref_conv(x2d, params["w2"], params["b2"], "relu")
    x1d = _ref_unpool(x2d, t(idx1p))
    x1d = _ref_conv(x1d, params["w1"], params["b1"], "relu")
    xp = _ref_conv(x1d, params["wp"], params["bp"], "clamp01")
    return jnp.transpose(xp, (0, 3, 1, 2))


def make_pool_indices(key, shape):
    """Valid MaxPool2d(2,2) indices for a (N,C,H,W) tensor: flat into (2H)*(2W)."""
    N, C, H, W = shape
    k1, k2 = jax.random.split(key)
    dr = jax.random.randint(k1, shape, 0, 2)
    dc = jax.random.randint(k2, shape, 0, 2)
    h = jnp.arange(H).reshape(1, 1, H, 1)
    w = jnp.arange(W).reshape(1, 1, 1, W)
    idx = (2 * h + dr) * (2 * W) + (2 * w + dc)
    return idx.astype(jnp.int32)


if __name__ == "__main__":
    key = jax.random.PRNGKey(0)
    k_par, k_x6, k_i5, k_i4, k_i3, k_i2, k_i1, k_xf = jax.random.split(key, 8)

    params = init_dim_decoder_params(k_par)

    # Small spatial sizes consistent with a VGG/DIM pyramid: H6 = 2, H3 = 8.
    N, H6, W6 = 1, 2, 2
    x6 = jax.random.normal(k_x6, (N, 4096, H6, W6), jnp.float32)
    idx5p = make_pool_indices(k_i5, (N, 512, H6, W6))           # unpool -> 4x4
    idx4p = make_pool_indices(k_i4, (N, 512, 2 * H6, 2 * W6))   # unpool -> 8x8
    H3, W3 = 4 * H6, 4 * W6
    idx3p = make_pool_indices(k_i3, (N, 256, H3, W3))           # unpool -> 16x16
    idx2p = make_pool_indices(k_i2, (N, 128, 2 * H3, 2 * W3))   # unpool -> 32x32
    idx1p = make_pool_indices(k_i1, (N, 64, 4 * H3, 4 * W3))    # unpool -> 64x64
    x_fam = jax.random.normal(k_xf, (N, 256, H3, W3), jnp.float32)

    inputs = (idx1p, idx2p, idx3p, idx4p, idx5p, x6)

    # Branch 1: extract_feature=True
    x4d = dim_decoder_forward(params, inputs, extract_feature=True)
    x4d = jax.block_until_ready(x4d)
    assert x4d.shape == (N, 256, 4 * H6, 4 * W6)
    ref1 = _ref_forward_extract(params, inputs)
    err1 = float(jnp.max(jnp.abs(x4d - ref1)))
    assert err1 < 0.2, f"extract-feature branch mismatch: max abs err {err1}"

    # Branch 2: extract_feature=False (FAM output supplied directly)
    xpred, attb, attf, mask = dim_decoder_forward(
        params, inputs, extract_feature=False, x=x_fam)
    xpred = jax.block_until_ready(xpred)
    assert xpred.shape == (N, 1, 8 * H3, 8 * W3)
    assert float(jnp.min(xpred)) >= 0.0 and float(jnp.max(xpred)) <= 1.0
    ref2 = _ref_forward_predict(params, inputs, x_fam)
    err2 = float(jnp.max(jnp.abs(xpred - ref2)))
    assert err2 < 0.2, f"alpha-pred branch mismatch: max abs err {err2}"

    print("KERNEL_OK")
</pallas_src>

<mosaic_0001>
module attributes {stable_mosaic.version = 11 : i64} {
  func.func @_matmul_bias_act_kernel(%arg0: i32, %arg1: i32, %arg2: i32, %arg3: memref<4x1024xbf16, #tpu.memory_space<vmem>>, %arg4: memref<1024x256xbf16, #tpu.memory_space<vmem>>, %arg5: memref<1x256xf32, #tpu.memory_space<vmem>>, %arg6: memref<4x256xbf16, #tpu.memory_space<vmem>>, %arg7: memref<4x256xf32, #tpu.memory_space<vmem>>) attributes {dimension_semantics = [#tpu.dimension_semantics<parallel>, #tpu.dimension_semantics<parallel>, #tpu.dimension_semantics<arbitrary>], iteration_bounds = array<i64: 1, 2, 4>, scalar_prefetch = 0 : i64, scratch_operands = 1 : i64, tpu.core_type = #tpu.core_type<tc>, window_params = [{transform_indices = @transform_0, window_bounds = array<i64: 4, 1024>}, {transform_indices = @transform_1, window_bounds = array<i64: 1024, 256>}, {transform_indices = @transform_2, window_bounds = array<i64: 1, 256>}, {transform_indices = @transform_3, window_bounds = array<i64: 4, 256>}]} {
    %c0_i32 = arith.constant 0 : i32
    %0 = arith.cmpi eq, %arg2, %c0_i32 : i32
    %1 = arith.extui %0 : i1 to i32
    %c0_i32_0 = arith.constant 0 : i32
    %2 = arith.cmpi ne, %1, %c0_i32_0 : i32
    scf.if %2 {
      %cst_9 = arith.constant 0.000000e+00 : f32
      %12 = vector.broadcast %cst_9 : f32 to vector<4x256xf32>
      %c0_10 = arith.constant 0 : index
      %c0_11 = arith.constant 0 : index
      %13 = vector.load %arg7[%c0_10, %c0_11] : memref<4x256xf32, #tpu.memory_space<vmem>>, vector<4x256xf32>
      tpu.vector_store %arg7[%c0_10, %c0_11], %12 {strides = array<i32>} : memref<4x256xf32, #tpu.memory_space<vmem>>, vector<4x256xf32>,
    } else {
    }
    %c0 = arith.constant 0 : index
    %c0_1 = arith.constant 0 : index
    %3 = vector.load %arg7[%c0, %c0_1] : memref<4x256xf32, #tpu.memory_space<vmem>>, vector<4x256xf32>
    %c0_2 = arith.constant 0 : index
    %c0_3 = arith.constant 0 : index
    %4 = vector.load %arg3[%c0_2, %c0_3] : memref<4x1024xbf16, #tpu.memory_space<vmem>>, vector<4x1024xbf16>
    %c0_4 = arith.constant 0 : index
    %c0_5 = arith.constant 0 : index
    %5 = vector.load %arg4[%c0_4, %c0_5] : memref<1024x256xbf16, #tpu.memory_space<vmem>>, vector<1024x256xbf16>
    %cst = arith.constant dense<0.000000e+00> : vector<4x256xf32>
    %6 = tpu.matmul %4, %5, %cst {dimension_numbers = #tpu.dot_dimension_numbers<[1], [0], [0], [1], [0, 0, 1, 1], [], []>} : vector<4x1024xbf16>, vector<1024x256xbf16>, vector<4x256xf32> -> vector<4x256xf32>
    %7 = arith.addf %3, %6 : vector<4x256xf32>
    %c0_6 = arith.constant 0 : index
    %c0_7 = arith.constant 0 : index
    %8 = vector.load %arg7[%c0_6, %c0_7] : memref<4x256xf32, #tpu.memory_space<vmem>>, vector<4x256xf32>
    tpu.vector_store %arg7[%c0_6, %c0_7], %7 {strides = array<i32>} : memref<4x256xf32, #tpu.memory_space<vmem>>, vector<4x256xf32>,
    %c3_i32 = arith.constant 3 : i32
    %9 = arith.cmpi eq, %arg2, %c3_i32 : i32
    %10 = arith.extui %9 : i1 to i32
    %c0_i32_8 = arith.constant 0 : i32
    %11 = arith.cmpi ne, %10, %c0_i32_8 : i32
    scf.if %11 {
      %c0_9 = arith.constant 0 : index
      %c0_10 = arith.constant 0 : index
      %12 = vector.load %arg7[%c0_9, %c0_10] : memref<4x256xf32, #tpu.memory_space<vmem>>, vector<4x256xf32>
      %c0_11 = arith.constant 0 : index
      %c0_12 = arith.constant 0 : index
      %13 = vector.load %arg5[%c0_11, %c0_12] : memref<1x256xf32, #tpu.memory_space<vmem>>, vector<1x256xf32>
      %14 = vector.broadcast %13 : vector<1x256xf32> to vector<4x256xf32>
      %15 = arith.addf %12, %14 : vector<4x256xf32>
      %cst_13 = arith.constant 0.000000e+00 : f32
      %16 = vector.broadcast %cst_13 : f32 to vector<4x256xf32>
      %17 = arith.maximumf %15, %16 : vector<4x256xf32>
      %18 = arith.truncf %17 : vector<4x256xf32> to vector<4x256xbf16>
      %c0_14 = arith.constant 0 : index
      %c0_15 = arith.constant 0 : index
      %19 = vector.load %arg6[%c0_14, %c0_15] : memref<4x256xbf16, #tpu.memory_space<vmem>>, vector<4x256xbf16>
      tpu.vector_store %arg6[%c0_14, %c0_15], %18 {strides = array<i32>} : memref<4x256xbf16, #tpu.memory_space<vmem>>, vector<4x256xbf16>,
    } else {
    }
    return
  }
  func.func @transform_0(%arg0: i32, %arg1: i32, %arg2: i32) -> (i32, i32) {
    %c0_i32 = arith.constant 0 : i32
    return %arg0, %arg2 : i32, i32
  }
  func.func @transform_1(%arg0: i32, %arg1: i32, %arg2: i32) -> (i32, i32) {
    %c0_i32 = arith.constant 0 : i32
    return %arg2, %arg1 : i32, i32
  }
  func.func @transform_2(%arg0: i32, %arg1: i32, %arg2: i32) -> (i32, i32) {
    %c0_i32 = arith.constant 0 : i32
    %c0_i32_0 = arith.constant 0 : i32
    return %c0_i32, %arg1 : i32, i32
  }
  func.func @transform_3(%arg0: i32, %arg1: i32, %arg2: i32) -> (i32, i32) {
    %c0_i32 = arith.constant 0 : i32
    return %arg0, %arg1 : i32, i32
  }
}

</mosaic_0001>

<llo_original>
// kernel: tpu_custom_call.1
$region0: #{tpu_custom_call.1}
  #allocation0 [shape = 'u32[]', space=smem, size = 0x4, offset = 0x4, fixed_abs, tag = 'smem constant byte address 0x4 - core index']
  #allocation1 [shape = 'u32[144,128]{1,0:T(1,128)}', space=vmem, size = 0x12000, scoped, tag = 'internal scratch']
  #allocation2 [shape = 'f32[4,256]{1,0:T(4,128)}', space=vmem, size = 0x1000, scoped, tag = 'scratch operand']
  %s0 = inlined_call_operand.hbm [shape: bf16[4,4096], index: 0, kind: input, shape index: {}]
  %s1 = inlined_call_operand.hbm [shape: bf16[4096,512], index: 1, kind: input, shape index: {}]
  %s2 = inlined_call_operand.hbm [shape: f32[1,512], index: 2, kind: input, shape index: {}]
  %s3 = inlined_call_operand.hbm [shape: bf16[4,512], index: 3, kind: output, shape index: {}]
  %s4 = sld [smem:[#allocation0]]
  $region65: #{tpu_custom_call.1} parent=0
    _
  %s6 = ssub.s32 1, %s4
  %s7 = scalar_select 0, %s6, %s4
  $region1: #{tpu_custom_call.1} parent=0
    #allocation3 [shape = 'u8[16384]{0}', space=vmem, size = 0x4000, scoped, tag = 'input window, operand 0']
    #allocation4 [shape = 's32[2]{0}', space=sflag, size = 0x8, scoped, tag = 'scoped memory for tpu_custom_call.1']
    #allocation5 [shape = 's32[2]{0}', space=sflag, size = 0x8, scoped, tag = 'scoped memory for tpu_custom_call.1']
    #allocation6 [shape = 'u8[1048576]{0}', space=vmem, size = 0x100000, scoped, tag = 'input window, operand 1']
    #allocation7 [shape = 's32[2]{0}', space=sflag, size = 0x8, scoped, tag = 'scoped memory for tpu_custom_call.1']
    #allocation8 [shape = 'u8[2048]{0}', space=vmem, size = 0x800, scoped, tag = 'input window, operand 2']
    #allocation9 [shape = 'u8[4096]{0}', space=vmem, size = 0x1000, scoped, tag = 'output window, operand 0']
    %8 = vsyncpa [#allocation4], 0
    %s9 = scalar_lea.sflag [#allocation4], 1
    %10 = vsyncpa %s9, 0
    %11 = vsyncpa [#allocation7], 0
    %s12 = scalar_lea.sflag [#allocation7], 1
    %13 = vsyncpa %s12, 0
    %14 = vsyncpa [#allocation5], 0
    %s15 = scalar_lea.sflag [#allocation5], 1
    %16 = vsyncpa %s15, 0
    loop: start=0, step=1, limit=10
    $region2: #{tpu_custom_call.1} parent=1 // loop_pre_header
      _
    $region3: #{tpu_custom_call.1} parent=1 // loop_header
      %s18 = sphi 0, %s22
      %p19 = scmp.ge.s32.totalorder %s18, 10
      %s25 = sphi 0, %s44
      %s26 = sphi 0, %s40
      %s27 = sphi 0, %s36
      %s28 = sphi 0, %s25
      %s29 = sphi 0, %s26
      %s30 = sphi 0, %s27
      %s31 = sphi 0, %s28
      %s32 = sphi 0, %s29
      %s33 = sphi 0, %s30
      %s49 = sphi 0, %s51
      %s52 = sphi 0, %s49
      %s53 = sphi 0, %s52
      %s69 = sphi 0, %s53
      %s77 = sphi 0, %s79
      %s80 = sphi 0, %s77
      %s81 = sphi 0, %s80
      %s97 = sphi 0, %s81
      %s103 = sphi 0, %s105
      %s106 = sphi 0, %s103
      %s107 = sphi 0, %s106
      %s123 = sphi 0, %s107
      %s131 = sphi 0, %s133
      %s134 = sphi 0, %s131
      %s135 = sphi 0, %s134
      %s151 = sphi 0, %s135
    $region4: #{tpu_custom_call.1} parent=1 // loop_header_branch
      %21 = sbr.rel (%p19) target = $region8
    $region5: #{tpu_custom_call.1} parent=1 // loop_body
      %s23 = ssub.s32 %s18, 1
      %s24 = ssub.s32 %s18, 2
      %s34 = sadd.s32 1, %s27
      %p35 = scmp.ge.s32.totalorder %s34, 4
      %s36 = scalar_select %p35, 0, %s34
      %s37 = sadd.s32 1, %s26
      %s38 = scalar_select %p35, %s37, %s26
      %p39 = scmp.ge.s32.totalorder %s38, 2
      %s40 = scalar_select %p39, 0, %s38
      %s41 = sadd.s32 1, %s25
      %s42 = scalar_select %p39, %s41, %s25
      %p43 = scmp.ge.s32.totalorder %s42, 1
      %s44 = scalar_select %p43, 0, %s42
      %s45 = ssub.s32 %s25, %s44
      %s46 = ssub.s32 %s27, %s36
      %s47 = sor.u32 %s45, %s46
      %p48 = scmp.eq.s32.totalorder %s47, 0
      %s50 = sadd.s32 %s49, 1
      %s51 = scalar_select %p48, %s49, %s50
      %p54 = pneg %p48
      %p55 = scmp.eq.s32.totalorder %s18, 7
      %p56 = por %p54, %p55
      %p57 = scmp.ne.s32.totalorder %s49, %s52
      %p58 = scmp.eq.s32.totalorder %s18, 0
      %p59 = por %p57, %p58
      %p60 = scmp.ne.s32.totalorder %s49, %s52
      %p61 = scmp.eq.s32.totalorder %s23, 7
      %p62 = por %p60, %p61
      %p63 = scmp.ne.s32.totalorder %s52, %s53
      %p64 = scmp.eq.s32.totalorder %s23, 0
      %p65 = por %p63, %p64
      %p66 = scmp.ne.s32.totalorder %s52, %s53
      %p67 = scmp.eq.s32.totalorder %s24, 7
      %p68 = por %p66, %p67
      %p70 = scmp.ne.s32.totalorder %s53, %s69
      %p71 = scmp.eq.s32.totalorder %s24, 0
      %p72 = por %p70, %p71
      %s73 = ssub.s32 %s27, %s36
      %s74 = ssub.s32 %s26, %s40
      %s75 = sor.u32 %s73, %s74
      %p76 = scmp.eq.s32.totalorder %s75, 0
      %s78 = sadd.s32 %s77, 1
      %s79 = scalar_select %p76, %s77, %s78
      %p82 = pneg %p76
      %p83 = scmp.eq.s32.totalorder %s18, 7
      %p84 = por %p82, %p83
      %p85 = scmp.ne.s32.totalorder %s77, %s80
      %p86 = scmp.eq.s32.totalorder %s18, 0
      %p87 = por %p85, %p86
      %p88 = scmp.ne.s32.totalorder %s77, %s80
      %p89 = scmp.eq.s32.totalorder %s23, 7
      %p90 = por %p88, %p89
      %p91 = scmp.ne.s32.totalorder %s80, %s81
      %p92 = scmp.eq.s32.totalorder %s23, 0
      %p93 = por %p91, %p92
      %p94 = scmp.ne.s32.totalorder %s80, %s81
      %p95 = scmp.eq.s32.totalorder %s24, 7
      %p96 = por %p94, %p95
      %p98 = scmp.ne.s32.totalorder %s81, %s97
      %p99 = scmp.eq.s32.totalorder %s24, 0
      %p100 = por %p98, %p99
      %s101 = ssub.s32 %s26, %s40
      %p102 = scmp.eq.s32.totalorder %s101, 0
      %s104 = sadd.s32 %s103, 1
      %s105 = scalar_select %p102, %s103, %s104
      %p108 = pneg %p102
      %p109 = scmp.eq.s32.totalorder %s18, 7
      %p110 = por %p108, %p109
      %p111 = scmp.ne.s32.totalorder %s103, %s106
      %p112 = scmp.eq.s32.totalorder %s18, 0
      %p113 = por %p111, %p112
      %p114 = scmp.ne.s32.totalorder %s103, %s106
      %p115 = scmp.eq.s32.totalorder %s23, 7
      %p116 = por %p114, %p115
      %p117 = scmp.ne.s32.totalorder %s106, %s107
      %p118 = scmp.eq.s32.totalorder %s23, 0
      %p119 = por %p117, %p118
      %p120 = scmp.ne.s32.totalorder %s106, %s107
      %p121 = scmp.eq.s32.totalorder %s24, 7
      %p122 = por %p120, %p121
      %p124 = scmp.ne.s32.totalorder %s107, %s123
      %p125 = scmp.eq.s32.totalorder %s24, 0
      %p126 = por %p124, %p125
      %s127 = ssub.s32 %s25, %s44
      %s128 = ssub.s32 %s26, %s40
      %s129 = sor.u32 %s127, %s128
      %p130 = scmp.eq.s32.totalorder %s129, 0
      %s132 = sadd.s32 %s131, 1
      %s133 = scalar_select %p130, %s131, %s132
      %p136 = pneg %p130
      %p137 = scmp.eq.s32.totalorder %s18, 7
      %p138 = por %p136, %p137
      %p139 = scmp.ne.s32.totalorder %s131, %s134
      %p140 = scmp.eq.s32.totalorder %s18, 0
      %p141 = por %p139, %p140
      %p142 = scmp.ne.s32.totalorder %s131, %s134
      %p143 = scmp.eq.s32.totalorder %s23, 7
      %p144 = por %p142, %p143
      %p145 = scmp.ne.s32.totalorder %s134, %s135
      %p146 = scmp.eq.s32.totalorder %s23, 0
      %p147 = por %p145, %p146
      %p148 = scmp.ne.s32.totalorder %s134, %s135
      %p149 = scmp.eq.s32.totalorder %s24, 7
      %p150 = por %p148, %p149
      %p152 = scmp.ne.s32.totalorder %s135, %s151
      %p153 = scmp.eq.s32.totalorder %s24, 0
      %p154 = por %p152, %p153
      %p155 = scmp.le.s32.totalorder 1, %s18
      %p156 = scmp.lt.s32.totalorder %s18, 9
      %p157 = pnand %p155, %p156
      %p158 = pneg %p157
      // Predicated region
      $region9: #{tpu_custom_call.1} parent=5 // pred_check
        _
      $region10: #{tpu_custom_call.1} parent=5 // pred_check_branch
        %160 = sbr.rel (%p157) target = $region12
      $region11: #{tpu_custom_call.1} parent=5 // pred_region
        %s161 = ssub.s32 %s18, 1
      $region12: #{tpu_custom_call.1} parent=5 // pred_fallthru
        _
      %p162 = scmp.lt.s32.totalorder %s18, 8
      // Predicated region
      $region13: #{tpu_custom_call.1} parent=5 // pred_check
        %p163 = pneg %p162
      $region14: #{tpu_custom_call.1} parent=5 // pred_check_branch
        %165 = sbr.rel (%p163) target = $region16
      $region15: #{tpu_custom_call.1} parent=5 // pred_region
        // Predicated region
        $region17: #{tpu_custom_call.1} parent=15 // pred_check
          %p166 = pneg %p59
        $region18: #{tpu_custom_call.1} parent=15 // pred_check_branch
          %168 = sbr.rel (%p166) target = $region20
        $region19: #{tpu_custom_call.1} parent=15 // pred_region
          %s169 = sand.u32 %s49, 1
          %s170 = scalar_lea.sflag [#allocation4], %s169
          %s171 = sand.u32 %s49, 1
          %s172 = smul.addr %s171, 16
          %s173 = scalar_lea.vmem [#allocation3], %s172
          %s174 = smul.u32 8, %s27
          %s176 = ssub.s32 256, 256
          %177 = vsyncadd %s170, %s176
          %s178 = smul.addr %s25, 32
          %s179 = sadd.s32 %s174, %s178
          %s180 = smul.addr %s179, 32
          %s181 = scalar_lea.hbm %s0, %s180
          %s183 = sshll.u32 %s173, 4
          %s184 = int_to_ptr.vmem [resolvable:$true] %s183
          %186 = dma.hbm_to_vmem [thread:$0]  %s181, 256, %s184, %s170
        $region20: #{tpu_custom_call.1} parent=15 // pred_fallthru
          _
        // Predicated region
        $region21: #{tpu_custom_call.1} parent=15 // pred_check
          %p187 = pneg %p87
        $region22: #{tpu_custom_call.1} parent=15 // pred_check_branch
          %189 = sbr.rel (%p187) target = $region24
        $region23: #{tpu_custom_call.1} parent=15 // pred_region
          %s190 = sand.u32 %s18, 1
          %s191 = scalar_lea.sflag [#allocation7], %s190
          %s192 = sand.u32 %s77, 1
          %s193 = smul.addr %s192, 1024
          %s194 = scalar_lea.vmem [#allocation6], %s193
          %s195 = smul.u32 128, %s27
          %s196 = smul.u32 2, %s26
          %s198 = ssub.s32 16384, 16384
          %199 = vsyncadd %s191, %s198
          %s200 = smul.addr %s195, 4
          %s201 = sadd.s32 %s196, %s200
          %s202 = smul.addr %s201, 64
          %s203 = scalar_lea.hbm %s1, %s202
          %s204 = sshll.u32 %s194, 4
          %s205 = int_to_ptr.vmem [resolvable:$true] %s204
          %210 = dma.hbm_to_vmem [thread:$0]  %s203, 16384, %s205, %s191, 256, 128, 8
        $region24: #{tpu_custom_call.1} parent=15 // pred_fallthru
          _
        // Predicated region
        $region25: #{tpu_custom_call.1} parent=15 // pred_check
          %p211 = pneg %p113
        $region26: #{tpu_custom_call.1} parent=15 // pred_check_branch
          %213 = sbr.rel (%p211) target = $region28
        $region27: #{tpu_custom_call.1} parent=15 // pred_region
          %s214 = sand.u32 %s18, 1
          %s215 = scalar_lea.sflag [#allocation7], %s214
          %s216 = sand.u32 %s103, 1
          %s217 = smul.addr %s216, 2
          %s218 = scalar_lea.vmem [#allocation8], %s217
          %s219 = smul.u32 2, %s26
          %s221 = ssub.s32 32, 32
          %222 = vsyncadd %s215, %s221
          %s223 = smul.addr %s219, 16
          %s224 = scalar_lea.hbm %s2, %s223
          %s226 = sshll.u32 %s218, 4
          %s227 = int_to_ptr.vmem [resolvable:$true] %s226
          %229 = dma.hbm_to_vmem [thread:$0]  %s224, 32, %s227, %s215
        $region28: #{tpu_custom_call.1} parent=15 // pred_fallthru
          _
      $region16: #{tpu_custom_call.1} parent=5 // pred_fallthru
        _
      %p230 = scmp.le.s32.totalorder 1, %s18
      %p231 = scmp.lt.s32.totalorder %s18, 9
      %p232 = pnand %p230, %p231
      %p233 = pneg %p232
      // Predicated region
      $region29: #{tpu_custom_call.1} parent=5 // pred_check
        _
      $region30: #{tpu_custom_call.1} parent=5 // pred_check_branch
        %235 = sbr.rel (%p232) target = $region32
      $region31: #{tpu_custom_call.1} parent=5 // pred_region
        %s236 = ssub.s32 %s18, 1
        %s237 = sand.u32 %s52, 1
        %s238 = scalar_lea.sflag [#allocation4], %s237
        %s239 = sand.u32 %s52, 1
        %s240 = smul.addr %s239, 16
        %s241 = scalar_lea.vmem [#allocation3], %s240
        // Predicated region
        $region33: #{tpu_custom_call.1} parent=31 // pred_check
          %p242 = pneg %p65
        $region34: #{tpu_custom_call.1} parent=31 // pred_check_branch
          %244 = sbr.rel (%p242) target = $region36
        $region35: #{tpu_custom_call.1} parent=31 // pred_region
          %245 = dma.done %s238, 256
        $region36: #{tpu_custom_call.1} parent=31 // pred_fallthru
          _
        %s246 = sand.u32 %s23, 1
        %s247 = scalar_lea.sflag [#allocation7], %s246
        %s248 = sand.u32 %s80, 1
        %s249 = smul.addr %s248, 1024
        %s250 = scalar_lea.vmem [#allocation6], %s249
        // Predicated region
        $region37: #{tpu_custom_call.1} parent=31 // pred_check
          %p251 = pneg %p93
        $region38: #{tpu_custom_call.1} parent=31 // pred_check_branch
          %253 = sbr.rel (%p251) target = $region40
        $region39: #{tpu_custom_call.1} parent=31 // pred_region
          %254 = dma.done %s247, 16384
        $region40: #{tpu_custom_call.1} parent=31 // pred_fallthru
          _
        %s255 = sand.u32 %s23, 1
        %s256 = scalar_lea.sflag [#allocation7], %s255
        %s257 = sand.u32 %s106, 1
        %s258 = smul.addr %s257, 2
        %s259 = scalar_lea.vmem [#allocation8], %s258
        // Predicated region
        $region41: #{tpu_custom_call.1} parent=31 // pred_check
          %p260 = pneg %p119
        $region42: #{tpu_custom_call.1} parent=31 // pred_check_branch
          %262 = sbr.rel (%p260) target = $region44
        $region43: #{tpu_custom_call.1} parent=31 // pred_region
          %263 = dma.done %s256, 32
        $region44: #{tpu_custom_call.1} parent=31 // pred_fallthru
          _
        %s264 = sand.u32 %s52, 1
        %s265 = scalar_lea.sflag [#allocation4], %s264
        %s266 = sand.u32 %s52, 1
        %s267 = smul.addr %s266, 16
        %s268 = scalar_lea.vmem [#allocation3], %s267
        %p269 = pneg %p65
        %p270 = pneg %p62
        %s271 = sand.u32 %s23, 1
        %s272 = scalar_lea.sflag [#allocation7], %s271
        %s273 = sand.u32 %s80, 1
        %s274 = smul.addr %s273, 1024
        %s275 = scalar_lea.vmem [#allocation6], %s274
        %p276 = pneg %p93
        %p277 = pneg %p90
        %s278 = sand.u32 %s23, 1
        %s279 = scalar_lea.sflag [#allocation7], %s278
        %s280 = sand.u32 %s106, 1
        %s281 = smul.addr %s280, 2
        %s282 = scalar_lea.vmem [#allocation8], %s281
        %p283 = pneg %p119
        %p284 = pneg %p116
        %p285 = pneg %p147
        %p286 = pneg %p144
        %s287 = sand.u32 %s134, 1
        %s288 = scalar_lea.sflag [#allocation5], %s287
        %s289 = sand.u32 %s134, 1
        %s290 = smul.addr %s289, 4
        %s291 = scalar_lea.vmem [#allocation9], %s290
        %s292 = smul.u32 8, %s30
        %s293 = smul.u32 128, %s30
        %s294 = smul.u32 2, %s29
        %s295 = smul.u32 2, %s29
        %s296 = smul.u32 2, %s29
        %p297 = scmp.eq.s32.totalorder %s30, 0
        // Predicated region
        $region45: #{tpu_custom_call.1} parent=31 // pred_check
          %p298 = pneg %p297
        $region46: #{tpu_custom_call.1} parent=31 // pred_check_branch
          %300 = sbr.rel (%p298) target = $region48
        $region47: #{tpu_custom_call.1} parent=31 // pred_region
          %301 = vst [vmem:[#allocation2] sm:$0xff] 0.0
        $region48: #{tpu_custom_call.1} parent=31 // pred_fallthru
          _
        %v302 = vld [vmem:[#allocation2] sm:$0xff]
        %v303 = vld [vmem:[%s241] sm:$0xff]
        %v304 = vld [vmem:[%s241 + $0x8] sm:$0xff]
        %v305 = vld [vmem:[%s250] sm:$0xff]
        %v306 = vld [vmem:[%s250 + $0x8] sm:$0xff]
        %v307 = vld [vmem:[%s250 + $0x10] sm:$0xff]
        %v308 = vld [vmem:[%s250 + $0x18] sm:$0xff]
        %v309 = vld [vmem:[%s250 + $0x20] sm:$0xff]
        %v310 = vld [vmem:[%s250 + $0x28] sm:$0xff]
        %v311 = vld [vmem:[%s250 + $0x30] sm:$0xff]
        %v312 = vld [vmem:[%s250 + $0x38] sm:$0xff]
        %v313 = vld [vmem:[%s250 + $0x40] sm:$0xff]
        %v314 = vld [vmem:[%s250 + $0x48] sm:$0xff]
        %v315 = vld [vmem:[%s250 + $0x50] sm:$0xff]
        %v316 = vld [vmem:[%s250 + $0x58] sm:$0xff]
        %v317 = vld [vmem:[%s250 + $0x60] sm:$0xff]
        %v318 = vld [vmem:[%s250 + $0x68] sm:$0xff]
        %v319 = vld [vmem:[%s250 + $0x70] sm:$0xff]
        %v320 = vld [vmem:[%s250 + $0x78] sm:$0xff]
        %v321 = vld [vmem:[%s250 + $0x80] sm:$0xff]
        %v322 = vld [vmem:[%s250 + $0x88] sm:$0xff]
        %v323 = vld [vmem:[%s250 + $0x90] sm:$0xff]
        %v324 = vld [vmem:[%s250 + $0x98] sm:$0xff]
        %v325 = vld [vmem:[%s250 + $0xa0] sm:$0xff]
        %v326 = vld [vmem:[%s250 + $0xa8] sm:$0xff]
        %v327 = vld [vmem:[%s250 + $0xb0] sm:$0xff]
        %v328 = vld [vmem:[%s250 + $0xb8] sm:$0xff]
        %v329 = vld [vmem:[%s250 + $0xc0] sm:$0xff]
        %v330 = vld [vmem:[%s250 + $0xc8] sm:$0xff]
        %v331 = vld [vmem:[%s250 + $0xd0] sm:$0xff]
        %v332 = vld [vmem:[%s250 + $0xd8] sm:$0xff]
        %v333 = vld [vmem:[%s250 + $0xe0] sm:$0xff]
        %v334 = vld [vmem:[%s250 + $0xe8] sm:$0xff]
        %v335 = vld [vmem:[%s250 + $0xf0] sm:$0xff]
        %v336 = vld [vmem:[%s250 + $0xf8] sm:$0xff]
        %v337 = vld [vmem:[%s250 + $0x100] sm:$0xff]
        %v338 = vld [vmem:[%s250 + $0x108] sm:$0xff]
        %v339 = vld [vmem:[%s250 + $0x110] sm:$0xff]
        %v340 = vld [vmem:[%s250 + $0x118] sm:$0xff]
        %v341 = vld [vmem:[%s250 + $0x120] sm:$0xff]
        %v342 = vld [vmem:[%s250 + $0x128] sm:$0xff]
        %v343 = vld [vmem:[%s250 + $0x130] sm:$0xff]
        %v344 = vld [vmem:[%s250 + $0x138] sm:$0xff]
        %v345 = vld [vmem:[%s250 + $0x140] sm:$0xff]
        %v346 = vld [vmem:[%s250 + $0x148] sm:$0xff]
        %v347 = vld [vmem:[%s250 + $0x150] sm:$0xff]
        %v348 = vld [vmem:[%s250 + $0x158] sm:$0xff]
        %v349 = vld [vmem:[%s250 + $0x160] sm:$0xff]
        %v350 = vld [vmem:[%s250 + $0x168] sm:$0xff]
        %v351 = vld [vmem:[%s250 + $0x170] sm:$0xff]
        %v352 = vld [vmem:[%s250 + $0x178] sm:$0xff]
        %v353 = vld [vmem:[%s250 + $0x180] sm:$0xff]
        %v354 = vld [vmem:[%s250 + $0x188] sm:$0xff]
        %v355 = vld [vmem:[%s250 + $0x190] sm:$0xff]
        %v356 = vld [vmem:[%s250 + $0x198] sm:$0xff]
        %v357 = vld [vmem:[%s250 + $0x1a0] sm:$0xff]
        %v358 = vld [vmem:[%s250 + $0x1a8] sm:$0xff]
        %v359 = vld [vmem:[%s250 + $0x1b0] sm:$0xff]
        %v360 = vld [vmem:[%s250 + $0x1b8] sm:$0xff]
        %v361 = vld [vmem:[%s250 + $0x1c0] sm:$0xff]
        %v362 = vld [vmem:[%s250 + $0x1c8] sm:$0xff]
        %v363 = vld [vmem:[%s250 + $0x1d0] sm:$0xff]
        %v364 = vld [vmem:[%s250 + $0x1d8] sm:$0xff]
        %v365 = vld [vmem:[%s250 + $0x1e0] sm:$0xff]
        %v366 = vld [vmem:[%s250 + $0x1e8] sm:$0xff]
        %v367 = vld [vmem:[%s250 + $0x1f0] sm:$0xff]
        %v368 = vld [vmem:[%s250 + $0x1f8] sm:$0xff]
        %v369 = vld [vmem:[%s250 + $0x200] sm:$0xff]
        %v370 = vld [vmem:[%s250 + $0x208] sm:$0xff]
        %v371 = vld [vmem:[%s250 + $0x210] sm:$0xff]
        %v372 = vld [vmem:[%s250 + $0x218] sm:$0xff]
        %v373 = vld [vmem:[%s250 + $0x220] sm:$0xff]
        %v374 = vld [vmem:[%s250 + $0x228] sm:$0xff]
        %v375 = vld [vmem:[%s250 + $0x230] sm:$0xff]
        %v376 = vld [vmem:[%s250 + $0x238] sm:$0xff]
        %v377 = vld [vmem:[%s250 + $0x240] sm:$0xff]
        %v378 = vld [vmem:[%s250 + $0x248] sm:$0xff]
        %v379 = vld [vmem:[%s250 + $0x250] sm:$0xff]
        %v380 = vld [vmem:[%s250 + $0x258] sm:$0xff]
        %v381 = vld [vmem:[%s250 + $0x260] sm:$0xff]
        %v382 = vld [vmem:[%s250 + $0x268] sm:$0xff]
        %v383 = vld [vmem:[%s250 + $0x270] sm:$0xff]
        %v384 = vld [vmem:[%s250 + $0x278] sm:$0xff]
        %v385 = vld [vmem:[%s250 + $0x280] sm:$0xff]
        %v386 = vld [vmem:[%s250 + $0x288] sm:$0xff]
        %v387 = vld [vmem:[%s250 + $0x290] sm:$0xff]
        %v388 = vld [vmem:[%s250 + $0x298] sm:$0xff]
        %v389 = vld [vmem:[%s250 + $0x2a0] sm:$0xff]
        %v390 = vld [vmem:[%s250 + $0x2a8] sm:$0xff]
        %v391 = vld [vmem:[%s250 + $0x2b0] sm:$0xff]
        %v392 = vld [vmem:[%s250 + $0x2b8] sm:$0xff]
        %v393 = vld [vmem:[%s250 + $0x2c0] sm:$0xff]
        %v394 = vld [vmem:[%s250 + $0x2c8] sm:$0xff]
        %v395 = vld [vmem:[%s250 + $0x2d0] sm:$0xff]
        %v396 = vld [vmem:[%s250 + $0x2d8] sm:$0xff]
        %v397 = vld [vmem:[%s250 + $0x2e0] sm:$0xff]
        %v398 = vld [vmem:[%s250 + $0x2e8] sm:$0xff]
        %v399 = vld [vmem:[%s250 + $0x2f0] sm:$0xff]
        %v400 = vld [vmem:[%s250 + $0x2f8] sm:$0xff]
        %v401 = vld [vmem:[%s250 + $0x300] sm:$0xff]
        %v402 = vld [vmem:[%s250 + $0x308] sm:$0xff]
        %v403 = vld [vmem:[%s250 + $0x310] sm:$0xff]
        %v404 = vld [vmem:[%s250 + $0x318] sm:$0xff]
        %v405 = vld [vmem:[%s250 + $0x320] sm:$0xff]
        %v406 = vld [vmem:[%s250 + $0x328] sm:$0xff]
        %v407 = vld [vmem:[%s250 + $0x330] sm:$0xff]
        %v408 = vld [vmem:[%s250 + $0x338] sm:$0xff]
        %v409 = vld [vmem:[%s250 + $0x340] sm:$0xff]
        %v410 = vld [vmem:[%s250 + $0x348] sm:$0xff]
        %v411 = vld [vmem:[%s250 + $0x350] sm:$0xff]
        %v412 = vld [vmem:[%s250 + $0x358] sm:$0xff]
        %v413 = vld [vmem:[%s250 + $0x360] sm:$0xff]
        %v414 = vld [vmem:[%s250 + $0x368] sm:$0xff]
        %v415 = vld [vmem:[%s250 + $0x370] sm:$0xff]
        %v416 = vld [vmem:[%s250 + $0x378] sm:$0xff]
        %v417 = vld [vmem:[%s250 + $0x380] sm:$0xff]
        %v418 = vld [vmem:[%s250 + $0x388] sm:$0xff]
        %v419 = vld [vmem:[%s250 + $0x390] sm:$0xff]
        %v420 = vld [vmem:[%s250 + $0x398] sm:$0xff]
        %v421 = vld [vmem:[%s250 + $0x3a0] sm:$0xff]
        %v422 = vld [vmem:[%s250 + $0x3a8] sm:$0xff]
        %v423 = vld [vmem:[%s250 + $0x3b0] sm:$0xff]
        %v424 = vld [vmem:[%s250 + $0x3b8] sm:$0xff]
        %v425 = vld [vmem:[%s250 + $0x3c0] sm:$0xff]
        %v426 = vld [vmem:[%s250 + $0x3c8] sm:$0xff]
        %v427 = vld [vmem:[%s250 + $0x3d0] sm:$0xff]
        %v428 = vld [vmem:[%s250 + $0x3d8] sm:$0xff]
        %v429 = vld [vmem:[%s250 + $0x3e0] sm:$0xff]
        %v430 = vld [vmem:[%s250 + $0x3e8] sm:$0xff]
        %v431 = vld [vmem:[%s250 + $0x3f0] sm:$0xff]
        %v432 = vld [vmem:[%s250 + $0x3f8] sm:$0xff]
        %v435 = vcombine.high %v303, %v303
        %v437 = vunpack.c.l.s4 1983009808
        %v438 = vunpack.c.0.s8 %v437
        %v439 = vlaneseq
        %v440 = vshrl.u32 %v439, 7
        %v441 = vsub.s32 %v438, %v440
        %v442 = vrot.slane %v303, %v441
        %v444 = vunpack.c.l.s4 1983009808
        %v445 = vunpack.c.0.s8 %v444
        %v446 = vlaneseq
        %v447 = vshrl.u32 %v446, 7
        %v448 = vsub.s32 %v445, %v447
        %v449 = vrot.slane %v435, %v448
        %v450 = vcombine.high %v442, %v442
        %v451 = vcombine.high %v449, %v449
        %v452 = vcombine.high %v304, %v304
        %v454 = vunpack.c.l.s4 1983009808
        %v455 = vunpack.c.0.s8 %v454
        %v456 = vlaneseq
        %v457 = vshrl.u32 %v456, 7
        %v458 = vsub.s32 %v455, %v457
        %v459 = vrot.slane %v304, %v458
        %v461 = vunpack.c.l.s4 1983009808
        %v462 = vunpack.c.0.s8 %v461
        %v463 = vlaneseq
        %v464 = vshrl.u32 %v463, 7
        %v465 = vsub.s32 %v462, %v464
        %v466 = vrot.slane %v452, %v465
        %v467 = vcombine.high %v459, %v459
        %v468 = vcombine.high %v466, %v466
        %v605 = vunpack.c.l.b16 %v305
        %v606 = vunpack.c.h.b16 %v305
        %v607 = vunpack.c.l.b16 %v306
        %v608 = vunpack.c.h.b16 %v306
        %v609 = vunpack.c.l.b16 %v307
        %v610 = vunpack.c.h.b16 %v307
        %v611 = vunpack.c.l.b16 %v308
        %v612 = vunpack.c.h.b16 %v308
        %v613 = vunpack.c.l.b16 %v309
        %v614 = vunpack.c.h.b16 %v309
        %v615 = vunpack.c.l.b16 %v310
        %v616 = vunpack.c.h.b16 %v310
        %v617 = vunpack.c.l.b16 %v311
        %v618 = vunpack.c.h.b16 %v311
        %v619 = vunpack.c.l.b16 %v312
        %v620 = vunpack.c.h.b16 %v312
        %v621 = vunpack.c.l.b16 %v313
        %v622 = vunpack.c.h.b16 %v313
        %v623 = vunpack.c.l.b16 %v314
        %v624 = vunpack.c.h.b16 %v314
        %v625 = vunpack.c.l.b16 %v315
        %v626 = vunpack.c.h.b16 %v315
        %v627 = vunpack.c.l.b16 %v316
        %v628 = vunpack.c.h.b16 %v316
        %v629 = vunpack.c.l.b16 %v317
        %v630 = vunpack.c.h.b16 %v317
        %v631 = vunpack.c.l.b16 %v318
        %v632 = vunpack.c.h.b16 %v318
        %v633 = vunpack.c.l.b16 %v319
        %v634 = vunpack.c.h.b16 %v319
        %v635 = vunpack.c.l.b16 %v320
        %v636 = vunpack.c.h.b16 %v320
        %v637 = vunpack.c.l.b16 %v321
        %v638 = vunpack.c.h.b16 %v321
        %v639 = vunpack.c.l.b16 %v322
        %v640 = vunpack.c.h.b16 %v322
        %v641 = vunpack.c.l.b16 %v323
        %v642 = vunpack.c.h.b16 %v323
        %v643 = vunpack.c.l.b16 %v324
        %v644 = vunpack.c.h.b16 %v324
        %v645 = vunpack.c.l.b16 %v325
        %v646 = vunpack.c.h.b16 %v325
        %v647 = vunpack.c.l.b16 %v326
        %v648 = vunpack.c.h.b16 %v326
        %v649 = vunpack.c.l.b16 %v327
        %v650 = vunpack.c.h.b16 %v327
        %v651 = vunpack.c.l.b16 %v328
        %v652 = vunpack.c.h.b16 %v328
        %v653 = vunpack.c.l.b16 %v329
        %v654 = vunpack.c.h.b16 %v329
        %v655 = vunpack.c.l.b16 %v330
        %v656 = vunpack.c.h.b16 %v330
        %v657 = vunpack.c.l.b16 %v331
        %v658 = vunpack.c.h.b16 %v331
        %v659 = vunpack.c.l.b16 %v332
        %v660 = vunpack.c.h.b16 %v332
        %v661 = vunpack.c.l.b16 %v333
        %v662 = vunpack.c.h.b16 %v333
        %v663 = vunpack.c.l.b16 %v334
        %v664 = vunpack.c.h.b16 %v334
        %v665 = vunpack.c.l.b16 %v335
        %v666 = vunpack.c.h.b16 %v335
        %v667 = vunpack.c.l.b16 %v336
        %v668 = vunpack.c.h.b16 %v336
        %v669 = vunpack.c.l.b16 %v337
        %v670 = vunpack.c.h.b16 %v337
        %v671 = vunpack.c.l.b16 %v338
        %v672 = vunpack.c.h.b16 %v338
        %v673 = vunpack.c.l.b16 %v339
        %v674 = vunpack.c.h.b16 %v339
        %v675 = vunpack.c.l.b16 %v340
        %v676 = vunpack.c.h.b16 %v340
        %v677 = vunpack.c.l.b16 %v341
        %v678 = vunpack.c.h.b16 %v341
        %v679 = vunpack.c.l.b16 %v342
        %v680 = vunpack.c.h.b16 %v342
        %v681 = vunpack.c.l.b16 %v343
        %v682 = vunpack.c.h.b16 %v343
        %v683 = vunpack.c.l.b16 %v344
        %v684 = vunpack.c.h.b16 %v344
        %v685 = vunpack.c.l.b16 %v345
        %v686 = vunpack.c.h.b16 %v345
        %v687 = vunpack.c.l.b16 %v346
        %v688 = vunpack.c.h.b16 %v346
        %v689 = vunpack.c.l.b16 %v347
        %v690 = vunpack.c.h.b16 %v347
        %v691 = vunpack.c.l.b16 %v348
        %v692 = vunpack.c.h.b16 %v348
        %v693 = vunpack.c.l.b16 %v349
        %v694 = vunpack.c.h.b16 %v349
        %v695 = vunpack.c.l.b16 %v350
        %v696 = vunpack.c.h.b16 %v350
        %v697 = vunpack.c.l.b16 %v351
        %v698 = vunpack.c.h.b16 %v351
        %v699 = vunpack.c.l.b16 %v352
        %v700 = vunpack.c.h.b16 %v352
        %v701 = vunpack.c.l.b16 %v353
        %v702 = vunpack.c.h.b16 %v353
        %v703 = vunpack.c.l.b16 %v354
        %v704 = vunpack.c.h.b16 %v354
        %v705 = vunpack.c.l.b16 %v355
        %v706 = vunpack.c.h.b16 %v355
        %v707 = vunpack.c.l.b16 %v356
        %v708 = vunpack.c.h.b16 %v356
        %v709 = vunpack.c.l.b16 %v357
        %v710 = vunpack.c.h.b16 %v357
        %v711 = vunpack.c.l.b16 %v358
        %v712 = vunpack.c.h.b16 %v358
        %v713 = vunpack.c.l.b16 %v359
        %v714 = vunpack.c.h.b16 %v359
        %v715 = vunpack.c.l.b16 %v360
        %v716 = vunpack.c.h.b16 %v360
        %v717 = vunpack.c.l.b16 %v361
        %v718 = vunpack.c.h.b16 %v361
        %v719 = vunpack.c.l.b16 %v362
        %v720 = vunpack.c.h.b16 %v362
        %v721 = vunpack.c.l.b16 %v363
        %v722 = vunpack.c.h.b16 %v363
        %v723 = vunpack.c.l.b16 %v364
        %v724 = vunpack.c.h.b16 %v364
        %v725 = vunpack.c.l.b16 %v365
        %v726 = vunpack.c.h.b16 %v365
        %v727 = vunpack.c.l.b16 %v366
        %v728 = vunpack.c.h.b16 %v366
        %v729 = vunpack.c.l.b16 %v367
        %v730 = vunpack.c.h.b16 %v367
        %v731 = vunpack.c.l.b16 %v368
        %v732 = vunpack.c.h.b16 %v368
        %v733 = vunpack.c.l.b16 %v369
        %v734 = vunpack.c.h.b16 %v369
        %v735 = vunpack.c.l.b16 %v370
        %v736 = vunpack.c.h.b16 %v370
        %v737 = vunpack.c.l.b16 %v371
        %v738 = vunpack.c.h.b16 %v371
        %v739 = vunpack.c.l.b16 %v372
        %v740 = vunpack.c.h.b16 %v372
        %v741 = vunpack.c.l.b16 %v373
        %v742 = vunpack.c.h.b16 %v373
        %v743 = vunpack.c.l.b16 %v374
        %v744 = vunpack.c.h.b16 %v374
        %v745 = vunpack.c.l.b16 %v375
        %v746 = vunpack.c.h.b16 %v375
        %v747 = vunpack.c.l.b16 %v376
        %v748 = vunpack.c.h.b16 %v376
        %v749 = vunpack.c.l.b16 %v377
        %v750 = vunpack.c.h.b16 %v377
        %v751 = vunpack.c.l.b16 %v378
        %v752 = vunpack.c.h.b16 %v378
        %v753 = vunpack.c.l.b16 %v379
        %v754 = vunpack.c.h.b16 %v379
        %v755 = vunpack.c.l.b16 %v380
        %v756 = vunpack.c.h.b16 %v380
        %v757 = vunpack.c.l.b16 %v381
        %v758 = vunpack.c.h.b16 %v381
        %v759 = vunpack.c.l.b16 %v382
        %v760 = vunpack.c.h.b16 %v382
        %v761 = vunpack.c.l.b16 %v383
        %v762 = vunpack.c.h.b16 %v383
        %v763 = vunpack.c.l.b16 %v384
        %v764 = vunpack.c.h.b16 %v384
        %v765 = vunpack.c.l.b16 %v385
        %v766 = vunpack.c.h.b16 %v385
        %v767 = vunpack.c.l.b16 %v386
        %v768 = vunpack.c.h.b16 %v386
        %v769 = vunpack.c.l.b16 %v387
        %v770 = vunpack.c.h.b16 %v387
        %v771 = vunpack.c.l.b16 %v388
        %v772 = vunpack.c.h.b16 %v388
        %v773 = vunpack.c.l.b16 %v389
        %v774 = vunpack.c.h.b16 %v389
        %v775 = vunpack.c.l.b16 %v390
        %v776 = vunpack.c.h.b16 %v390
        %v777 = vunpack.c.l.b16 %v391
        %v778 = vunpack.c.h.b16 %v391
        %v779 = vunpack.c.l.b16 %v392
        %v780 = vunpack.c.h.b16 %v392
        %v781 = vunpack.c.l.b16 %v393
        %v782 = vunpack.c.h.b16 %v393
        %v783 = vunpack.c.l.b16 %v394
        %v784 = vunpack.c.h.b16 %v394
        %v785 = vunpack.c.l.b16 %v395
        %v786 = vunpack.c.h.b16 %v395
        %v787 = vunpack.c.l.b16 %v396
        %v788 = vunpack.c.h.b16 %v396
        %v789 = vunpack.c.l.b16 %v397
        %v790 = vunpack.c.h.b16 %v397
        %v791 = vunpack.c.l.b16 %v398
        %v792 = vunpack.c.h.b16 %v398
        %v793 = vunpack.c.l.b16 %v399
        %v794 = vunpack.c.h.b16 %v399
        %v795 = vunpack.c.l.b16 %v400
        %v796 = vunpack.c.h.b16 %v400
        %v797 = vunpack.c.l.b16 %v401
        %v798 = vunpack.c.h.b16 %v401
        %v799 = vunpack.c.l.b16 %v402
        %v800 = vunpack.c.h.b16 %v402
        %v801 = vunpack.c.l.b16 %v403
        %v802 = vunpack.c.h.b16 %v403
        %v803 = vunpack.c.l.b16 %v404
        %v804 = vunpack.c.h.b16 %v404
        %v805 = vunpack.c.l.b16 %v405
        %v806 = vunpack.c.h.b16 %v405
        %v807 = vunpack.c.l.b16 %v406
        %v808 = vunpack.c.h.b16 %v406
        %v809 = vunpack.c.l.b16 %v407
        %v810 = vunpack.c.h.b16 %v407
        %v811 = vunpack.c.l.b16 %v408
        %v812 = vunpack.c.h.b16 %v408
        %v813 = vunpack.c.l.b16 %v409
        %v814 = vunpack.c.h.b16 %v409
        %v815 = vunpack.c.l.b16 %v410
        %v816 = vunpack.c.h.b16 %v410
        %v817 = vunpack.c.l.b16 %v411
        %v818 = vunpack.c.h.b16 %v411
        %v819 = vunpack.c.l.b16 %v412
        %v820 = vunpack.c.h.b16 %v412
        %v821 = vunpack.c.l.b16 %v413
        %v822 = vunpack.c.h.b16 %v413
        %v823 = vunpack.c.l.b16 %v414
        %v824 = vunpack.c.h.b16 %v414
        %v825 = vunpack.c.l.b16 %v415
        %v826 = vunpack.c.h.b16 %v415
        %v827 = vunpack.c.l.b16 %v416
        %v828 = vunpack.c.h.b16 %v416
        %v829 = vunpack.c.l.b16 %v417
        %v830 = vunpack.c.h.b16 %v417
        %v831 = vunpack.c.l.b16 %v418
        %v832 = vunpack.c.h.b16 %v418
        %v833 = vunpack.c.l.b16 %v419
        %v834 = vunpack.c.h.b16 %v419
        %v835 = vunpack.c.l.b16 %v420
        %v836 = vunpack.c.h.b16 %v420
        %v837 = vunpack.c.l.b16 %v421
        %v838 = vunpack.c.h.b16 %v421
        %v839 = vunpack.c.l.b16 %v422
        %v840 = vunpack.c.h.b16 %v422
        %v841 = vunpack.c.l.b16 %v423
        %v842 = vunpack.c.h.b16 %v423
        %v843 = vunpack.c.l.b16 %v424
        %v844 = vunpack.c.h.b16 %v424
        %v845 = vunpack.c.l.b16 %v425
        %v846 = vunpack.c.h.b16 %v425
        %v847 = vunpack.c.l.b16 %v426
        %v848 = vunpack.c.h.b16 %v426
        %v849 = vunpack.c.l.b16 %v427
        %v850 = vunpack.c.h.b16 %v427
        %v851 = vunpack.c.l.b16 %v428
        %v852 = vunpack.c.h.b16 %v428
        %v853 = vunpack.c.l.b16 %v429
        %v854 = vunpack.c.h.b16 %v429
        %v855 = vunpack.c.l.b16 %v430
        %v856 = vunpack.c.h.b16 %v430
        %v857 = vunpack.c.l.b16 %v431
        %v858 = vunpack.c.h.b16 %v431
        %v859 = vunpack.c.l.b16 %v432
        %v860 = vunpack.c.h.b16 %v432
        %v861 = vpack.c.b16 %v607, %v605
        %v862 = vpack.c.b16 %v608, %v606
        %v863 = vpack.c.b16 %v611, %v609
        %v864 = vpack.c.b16 %v612, %v610
        %v865 = vpack.c.b16 %v615, %v613
        %v866 = vpack.c.b16 %v616, %v614
        %v867 = vpack.c.b16 %v619, %v617
        %v868 = vpack.c.b16 %v620, %v618
        %v869 = vpack.c.b16 %v623, %v621
        %v870 = vpack.c.b16 %v624, %v622
        %v871 = vpack.c.b16 %v627, %v625
        %v872 = vpack.c.b16 %v628, %v626
        %v873 = vpack.c.b16 %v631, %v629
        %v874 = vpack.c.b16 %v632, %v630
        %v875 = vpack.c.b16 %v635, %v633
        %v876 = vpack.c.b16 %v636, %v634
        %v877 = vpack.c.b16 %v639, %v637
        %v878 = vpack.c.b16 %v640, %v638
        %v879 = vpack.c.b16 %v643, %v641
        %v880 = vpack.c.b16 %v644, %v642
        %v881 = vpack.c.b16 %v647, %v645
        %v882 = vpack.c.b16 %v648, %v646
        %v883 = vpack.c.b16 %v651, %v649
        %v884 = vpack.c.b16 %v652, %v650
        %v885 = vpack.c.b16 %v655, %v653
        %v886 = vpack.c.b16 %v656, %v654
        %v887 = vpack.c.b16 %v659, %v657
        %v888 = vpack.c.b16 %v660, %v658
        %v889 = vpack.c.b16 %v663, %v661
        %v890 = vpack.c.b16 %v664, %v662
        %v891 = vpack.c.b16 %v667, %v665
        %v892 = vpack.c.b16 %v668, %v666
        %v893 = vpack.c.b16 %v671, %v669
        %v894 = vpack.c.b16 %v672, %v670
        %v895 = vpack.c.b16 %v675, %v673
        %v896 = vpack.c.b16 %v676, %v674
        %v897 = vpack.c.b16 %v679, %v677
        %v898 = vpack.c.b16 %v680, %v678
        %v899 = vpack.c.b16 %v683, %v681
        %v900 = vpack.c.b16 %v684, %v682
        %v901 = vpack.c.b16 %v687, %v685
        %v902 = vpack.c.b16 %v688, %v686
        %v903 = vpack.c.b16 %v691, %v689
        %v904 = vpack.c.b16 %v692, %v690
        %v905 = vpack.c.b16 %v695, %v693
        %v906 = vpack.c.b16 %v696, %v694
        %v907 = vpack.c.b16 %v699, %v697
        %v908 = vpack.c.b16 %v700, %v698
        %v909 = vpack.c.b16 %v703, %v701
        %v910 = vpack.c.b16 %v704, %v702
        %v911 = vpack.c.b16 %v707, %v705
        %v912 = vpack.c.b16 %v708, %v706
        %v913 = vpack.c.b16 %v711, %v709
        %v914 = vpack.c.b16 %v712, %v710
        %v915 = vpack.c.b16 %v715, %v713
        %v916 = vpack.c.b16 %v716, %v714
        %v917 = vpack.c.b16 %v719, %v717
        %v918 = vpack.c.b16 %v720, %v718
        %v919 = vpack.c.b16 %v723, %v721
        %v920 = vpack.c.b16 %v724, %v722
        %v921 = vpack.c.b16 %v727, %v725
        %v922 = vpack.c.b16 %v728, %v726
        %v923 = vpack.c.b16 %v731, %v729
        %v924 = vpack.c.b16 %v732, %v730
        %v925 = vpack.c.b16 %v735, %v733
        %v926 = vpack.c.b16 %v736, %v734
        %v927 = vpack.c.b16 %v739, %v737
        %v928 = vpack.c.b16 %v740, %v738
        %v929 = vpack.c.b16 %v743, %v741
        %v930 = vpack.c.b16 %v744, %v742
        %v931 = vpack.c.b16 %v747, %v745
        %v932 = vpack.c.b16 %v748, %v746
        %v933 = vpack.c.b16 %v751, %v749
        %v934 = vpack.c.b16 %v752, %v750
        %v935 = vpack.c.b16 %v755, %v753
        %v936 = vpack.c.b16 %v756, %v754
        %v937 = vpack.c.b16 %v759, %v757
        %v938 = vpack.c.b16 %v760, %v758
        %v939 = vpack.c.b16 %v763, %v761
        %v940 = vpack.c.b16 %v764, %v762
        %v941 = vpack.c.b16 %v767, %v765
        %v942 = vpack.c.b16 %v768, %v766
        %v943 = vpack.c.b16 %v771, %v769
        %v944 = vpack.c.b16 %v772, %v770
        %v945 = vpack.c.b16 %v775, %v773
        %v946 = vpack.c.b16 %v776, %v774
        %v947 = vpack.c.b16 %v779, %v777
        %v948 = vpack.c.b16 %v780, %v778
        %v949 = vpack.c.b16 %v783, %v781
        %v950 = vpack.c.b16 %v784, %v782
        %v951 = vpack.c.b16 %v787, %v785
        %v952 = vpack.c.b16 %v788, %v786
        %v953 = vpack.c.b16 %v791, %v789
        %v954 = vpack.c.b16 %v792, %v790
        %v955 = vpack.c.b16 %v795, %v793
        %v956 = vpack.c.b16 %v796, %v794
        %v957 = vpack.c.b16 %v799, %v797
        %v958 = vpack.c.b16 %v800, %v798
        %v959 = vpack.c.b16 %v803, %v801
        %v960 = vpack.c.b16 %v804, %v802
        %v961 = vpack.c.b16 %v807, %v805
        %v962 = vpack.c.b16 %v808, %v806
        %v963 = vpack.c.b16 %v811, %v809
        %v964 = vpack.c.b16 %v812, %v810
        %v965 = vpack.c.b16 %v815, %v813
        %v966 = vpack.c.b16 %v816, %v814
        %v967 = vpack.c.b16 %v819, %v817
        %v968 = vpack.c.b16 %v820, %v818
        %v969 = vpack.c.b16 %v823, %v821
        %v970 = vpack.c.b16 %v824, %v822
        %v971 = vpack.c.b16 %v827, %v825
        %v972 = vpack.c.b16 %v828, %v826
        %v973 = vpack.c.b16 %v831, %v829
        %v974 = vpack.c.b16 %v832, %v830
        %v975 = vpack.c.b16 %v835, %v833
        %v976 = vpack.c.b16 %v836, %v834
        %v977 = vpack.c.b16 %v839, %v837
        %v978 = vpack.c.b16 %v840, %v838
        %v979 = vpack.c.b16 %v843, %v841
        %v980 = vpack.c.b16 %v844, %v842
        %v981 = vpack.c.b16 %v847, %v845
        %v982 = vpack.c.b16 %v848, %v846
        %v983 = vpack.c.b16 %v851, %v849
        %v984 = vpack.c.b16 %v852, %v850
        %v985 = vpack.c.b16 %v855, %v853
        %v986 = vpack.c.b16 %v856, %v854
        %v987 = vpack.c.b16 %v859, %v857
        %v988 = vpack.c.b16 %v860, %v858
        %1117 = vmatprep.subr.bf16.mxu0 %v862
        %1118 = vmatpush1.bf16.msra.mxu0 %v861
        %1119 = vmatprep.subr.bf16.mxu0 %v864
        %1120 = vmatpush1.bf16.msra.mxu0 %v863
        %1121 = vmatprep.subr.bf16.mxu0 %v866
        %1122 = vmatpush1.bf16.msra.mxu0 %v865
        %1123 = vmatprep.subr.bf16.mxu0 %v868
        %1124 = vmatpush1.bf16.msra.mxu0 %v867
        %1125 = vmatprep.subr.bf16.mxu0 %v870
        %1126 = vmatpush1.bf16.msra.mxu0 %v869
        %1127 = vmatprep.subr.bf16.mxu0 %v872
        %1128 = vmatpush1.bf16.msra.mxu0 %v871
        %1129 = vmatprep.subr.bf16.mxu0 %v874
        %1130 = vmatpush1.bf16.msra.mxu0 %v873
        %1131 = vmatprep.subr.bf16.mxu0 %v876
        %1132 = vmatpush1.bf16.msra.mxu0 %v875
        %1133 = vmatprep.subr.bf16.mxu0 %v878
        %1134 = vmatpush1.bf16.msra.mxu0 %v877
        %1135 = vmatprep.subr.bf16.mxu0 %v880
        %1136 = vmatpush1.bf16.msra.mxu0 %v879
        %1137 = vmatprep.subr.bf16.mxu0 %v882
        %1138 = vmatpush1.bf16.msra.mxu0 %v881
        %1139 = vmatprep.subr.bf16.mxu0 %v884
        %1140 = vmatpush1.bf16.msra.mxu0 %v883
        %1141 = vmatprep.subr.bf16.mxu0 %v886
        %1142 = vmatpush1.bf16.msra.mxu0 %v885
        %1143 = vmatprep.subr.bf16.mxu0 %v888
        %1144 = vmatpush1.bf16.msra.mxu0 %v887
        %1145 = vmatprep.subr.bf16.mxu0 %v890
        %1146 = vmatpush1.bf16.msra.mxu0 %v889
        %1147 = vmatprep.subr.bf16.mxu0 %v892
        %1148 = vmatpush1.bf16.msra.mxu0 %v891
        %1149 = vmatprep.mubr.bf16.mxu0 %v450
        %1150 = vmatmul.mubr.bf16.gmra.mrb[0].mxu0 %v442
        %v1151 = vpop.f32.mrb[0].mxu0
        %v1152 = vadd.f32 0.0, %v1151
        %v1153 = vpop.f32.mrb[0].mxu0
        %v1154 = vadd.f32 0.0, %v1153
        %v1155 = vpop.f32.mrb[0].mxu0
        %v1156 = vpop.f32.mrb[0].mxu0
        %1157 = vdwg.mxu0
        %1158 = vmatprep.subr.bf16.mxu0 %v894
        %1159 = vmatpush1.bf16.msra.mxu0 %v893
        %1160 = vmatprep.subr.bf16.mxu0 %v896
        %1161 = vmatpush1.bf16.msra.mxu0 %v895
        %1162 = vmatprep.subr.bf16.mxu0 %v898
        %1163 = vmatpush1.bf16.msra.mxu0 %v897
        %1164 = vmatprep.subr.bf16.mxu0 %v900
        %1165 = vmatpush1.bf16.msra.mxu0 %v899
        %1166 = vmatprep.subr.bf16.mxu0 %v902
        %1167 = vmatpush1.bf16.msra.mxu0 %v901
        %1168 = vmatprep.subr.bf16.mxu0 %v904
        %1169 = vmatpush1.bf16.msra.mxu0 %v903
        %1170 = vmatprep.subr.bf16.mxu0 %v906
        %1171 = vmatpush1.bf16.msra.mxu0 %v905
        %1172 = vmatprep.subr.bf16.mxu0 %v908
        %1173 = vmatpush1.bf16.msra.mxu0 %v907
        %1174 = vmatprep.subr.bf16.mxu0 %v910
        %1175 = vmatpush1.bf16.msra.mxu0 %v909
        %1176 = vmatprep.subr.bf16.mxu0 %v912
        %1177 = vmatpush1.bf16.msra.mxu0 %v911
        %1178 = vmatprep.subr.bf16.mxu0 %v914
        %1179 = vmatpush1.bf16.msra.mxu0 %v913
        %1180 = vmatprep.subr.bf16.mxu0 %v916
        %1181 = vmatpush1.bf16.msra.mxu0 %v915
        %1182 = vmatprep.subr.bf16.mxu0 %v918
        %1183 = vmatpush1.bf16.msra.mxu0 %v917
        %1184 = vmatprep.subr.bf16.mxu0 %v920
        %1185 = vmatpush1.bf16.msra.mxu0 %v919
        %1186 = vmatprep.subr.bf16.mxu0 %v922
        %1187 = vmatpush1.bf16.msra.mxu0 %v921
        %1188 = vmatprep.subr.bf16.mxu0 %v924
        %1189 = vmatpush1.bf16.msra.mxu0 %v923
        %1190 = vmatprep.mubr.bf16.mxu0 %v451
        %1191 = vmatmul.mubr.bf16.gmra.mrb[0].mxu0 %v449
        %v1192 = vpop.f32.mrb[0].mxu0
        %v1193 = vadd.f32 %v1152, %v1192
        %v1194 = vpop.f32.mrb[0].mxu0
        %v1195 = vadd.f32 %v1154, %v1194
        %v1196 = vpop.f32.mrb[0].mxu0
        %v1197 = vpop.f32.mrb[0].mxu0
        %1198 = vdwg.mxu0
        %1199 = vmatprep.subr.bf16.mxu0 %v926
        %1200 = vmatpush1.bf16.msra.mxu0 %v925
        %1201 = vmatprep.subr.bf16.mxu0 %v928
        %1202 = vmatpush1.bf16.msra.mxu0 %v927
        %1203 = vmatprep.subr.bf16.mxu0 %v930
        %1204 = vmatpush1.bf16.msra.mxu0 %v929
        %1205 = vmatprep.subr.bf16.mxu0 %v932
        %1206 = vmatpush1.bf16.msra.mxu0 %v931
        %1207 = vmatprep.subr.bf16.mxu0 %v934
        %1208 = vmatpush1.bf16.msra.mxu0 %v933
        %1209 = vmatprep.subr.bf16.mxu0 %v936
        %1210 = vmatpush1.bf16.msra.mxu0 %v935
        %1211 = vmatprep.subr.bf16.mxu0 %v938
        %1212 = vmatpush1.bf16.msra.mxu0 %v937
        %1213 = vmatprep.subr.bf16.mxu0 %v940
        %1214 = vmatpush1.bf16.msra.mxu0 %v939
        %1215 = vmatprep.subr.bf16.mxu0 %v942
        %1216 = vmatpush1.bf16.msra.mxu0 %v941
        %1217 = vmatprep.subr.bf16.mxu0 %v944
        %1218 = vmatpush1.bf16.msra.mxu0 %v943
        %1219 = vmatprep.subr.bf16.mxu0 %v946
        %1220 = vmatpush1.bf16.msra.mxu0 %v945
        %1221 = vmatprep.subr.bf16.mxu0 %v948
        %1222 = vmatpush1.bf16.msra.mxu0 %v947
        %1223 = vmatprep.subr.bf16.mxu0 %v950
        %1224 = vmatpush1.bf16.msra.mxu0 %v949
        %1225 = vmatprep.subr.bf16.mxu0 %v952
        %1226 = vmatpush1.bf16.msra.mxu0 %v951
        %1227 = vmatprep.subr.bf16.mxu0 %v954
        %1228 = vmatpush1.bf16.msra.mxu0 %v953
        %1229 = vmatprep.subr.bf16.mxu0 %v956
        %1230 = vmatpush1.bf16.msra.mxu0 %v955
        %1231 = vmatprep.mubr.bf16.mxu0 %v467
        %1232 = vmatmul.mubr.bf16.gmra.mrb[0].mxu0 %v459
        %v1233 = vpop.f32.mrb[0].mxu0
        %v1234 = vadd.f32 %v1193, %v1233
        %v1235 = vpop.f32.mrb[0].mxu0
        %v1236 = vadd.f32 %v1195, %v1235
        %v1237 = vpop.f32.mrb[0].mxu0
        %v1238 = vpop.f32.mrb[0].mxu0
        %1239 = vdwg.mxu0
        %1240 = vmatprep.subr.bf16.mxu0 %v958
        %1241 = vmatpush1.bf16.msra.mxu0 %v957
        %1242 = vmatprep.subr.bf16.mxu0 %v960
        %1243 = vmatpush1.bf16.msra.mxu0 %v959
        %1244 = vmatprep.subr.bf16.mxu0 %v962
        %1245 = vmatpush1.bf16.msra.mxu0 %v961
        %1246 = vmatprep.subr.bf16.mxu0 %v964
        %1247 = vmatpush1.bf16.msra.mxu0 %v963
        %1248 = vmatprep.subr.bf16.mxu0 %v966
        %1249 = vmatpush1.bf16.msra.mxu0 %v965
        %1250 = vmatprep.subr.bf16.mxu0 %v968
        %1251 = vmatpush1.bf16.msra.mxu0 %v967
        %1252 = vmatprep.subr.bf16.mxu0 %v970
        %1253 = vmatpush1.bf16.msra.mxu0 %v969
        %1254 = vmatprep.subr.bf16.mxu0 %v972
        %1255 = vmatpush1.bf16.msra.mxu0 %v971
        %1256 = vmatprep.subr.bf16.mxu0 %v974
        %1257 = vmatpush1.bf16.msra.mxu0 %v973
        %1258 = vmatprep.subr.bf16.mxu0 %v976
        %1259 = vmatpush1.bf16.msra.mxu0 %v975
        %1260 = vmatprep.subr.bf16.mxu0 %v978
        %1261 = vmatpush1.bf16.msra.mxu0 %v977
        %1262 = vmatprep.subr.bf16.mxu0 %v980
        %1263 = vmatpush1.bf16.msra.mxu0 %v979
        %1264 = vmatprep.subr.bf16.mxu0 %v982
        %1265 = vmatpush1.bf16.msra.mxu0 %v981
        %1266 = vmatprep.subr.bf16.mxu0 %v984
        %1267 = vmatpush1.bf16.msra.mxu0 %v983
        %1268 = vmatprep.subr.bf16.mxu0 %v986
        %1269 = vmatpush1.bf16.msra.mxu0 %v985
        %1270 = vmatprep.subr.bf16.mxu0 %v988
        %1271 = vmatpush1.bf16.msra.mxu0 %v987
        %1272 = vmatprep.mubr.bf16.mxu0 %v468
        %1273 = vmatmul.mubr.bf16.gmra.mrb[0].mxu0 %v466
        %v1274 = vpop.f32.mrb[0].mxu0
        %v1275 = vadd.f32 %v1234, %v1274
        %v1276 = vpop.f32.mrb[0].mxu0
        %v1277 = vadd.f32 %v1236, %v1276
        %v1278 = vpop.f32.mrb[0].mxu0
        %v1279 = vpop.f32.mrb[0].mxu0
        %1280 = vdwg.mxu0
        %v1283 = vcombine.low %v1275, %v1277
        %v1285 = vadd.f32 %v302, %v1283
        %1286 = vst [vmem:[#allocation2] sm:$0xff] %v1285
        %p1287 = scmp.eq.s32.totalorder %s30, 3
        // Predicated region
        $region49: #{tpu_custom_call.1} parent=31 // pred_check
          %p1288 = pneg %p1287
        $region50: #{tpu_custom_call.1} parent=31 // pred_check_branch
          %1290 = sbr.rel (%p1288) target = $region52
        $region51: #{tpu_custom_call.1} parent=31 // pred_region
          %v1291 = vld [vmem:[#allocation2] sm:$0xff]
          %v1292 = vld [vmem:[%s259] sm:$0x3]
          %v1294 = vlaneseq
          %v1295 = vshrl.u32 %v1294, 7
          %v1296 = vsub.s32 0, %v1295
          %v1297 = vrot.slane %v1292, %v1296
          %v1298 = vlaneseq
          %v1299 = vshrl.u32 %v1298, 7
          %v1300 = vsub.s32 1, %v1299
          %v1301 = vrot.slane %v1292, %v1300
          %v1302 = vcombine.low %v1297, %v1301
          %v1304 = vadd.f32 %v1291, %v1302
          %v1305 = vmax.f32 %v1304, 0.0
          %v1307 = vcombine.high %v1305, %v1305
          %v1309 = vpack.c.bf16 %v1305, %v1305
          %v1310 = vpack.c.bf16 %v1307, %v1307
          %v1313 = vcombine.low %v1309, %v1310
          %v1315 = vunpack.c.l.s4 1983009808
          %v1316 = vunpack.c.0.s8 %v1315
          %v1317 = vlaneseq
          %v1318 = vshrl.u32 %v1317, 7
          %v1319 = vsub.s32 %v1316, %v1318
          %v1320 = vrot.slane %v1313, %v1319
          %1322 = vst [vmem:[%s291] sm:$0xf] %v1320
        $region52: #{tpu_custom_call.1} parent=31 // pred_fallthru
          _
        %s1323 = sand.u32 %s134, 1
        %s1324 = scalar_lea.sflag [#allocation5], %s1323
        %s1325 = sand.u32 %s134, 1
        %s1326 = smul.addr %s1325, 4
        %s1327 = scalar_lea.vmem [#allocation9], %s1326
        // Predicated region
        $region53: #{tpu_custom_call.1} parent=31 // pred_check
          %p1328 = pneg %p144
        $region54: #{tpu_custom_call.1} parent=31 // pred_check_branch
          %1330 = sbr.rel (%p1328) target = $region56
        $region55: #{tpu_custom_call.1} parent=31 // pred_region
          %s1331 = smul.u32 2, %s29
          %s1333 = ssub.s32 64, 64
          %1334 = vsyncadd %s1324, %s1333
          %s1335 = smul.addr %s28, 4
          %s1336 = sadd.s32 %s1331, %s1335
          %s1337 = smul.addr %s1336, 32
          %s1338 = scalar_lea.hbm %s3, %s1337
          %s1340 = sshll.u32 %s1327, 4
          %s1341 = int_to_ptr.vmem [resolvable:$true] %s1340
          %1343 = dma.vmem_to_hbm [thread:$0]  %s1341, 64, %s1338, %s1324
        $region56: #{tpu_custom_call.1} parent=31 // pred_fallthru
          _
      $region32: #{tpu_custom_call.1} parent=5 // pred_fallthru
        _
      %p1344 = scmp.le.s32.totalorder 2, %s18
      // Predicated region
      $region57: #{tpu_custom_call.1} parent=5 // pred_check
        %p1345 = pneg %p1344
      $region58: #{tpu_custom_call.1} parent=5 // pred_check_branch
        %1347 = sbr.rel (%p1345) target = $region60
      $region59: #{tpu_custom_call.1} parent=5 // pred_region
        %s1348 = ssub.s32 %s18, 2
        // Predicated region
        $region61: #{tpu_custom_call.1} parent=59 // pred_check
          %p1349 = pneg %p150
        $region62: #{tpu_custom_call.1} parent=59 // pred_check_branch
          %1351 = sbr.rel (%p1349) target = $region64
        $region63: #{tpu_custom_call.1} parent=59 // pred_region
          %s1352 = sand.u32 %s135, 1
          %s1353 = scalar_lea.sflag [#allocation5], %s1352
          %s1354 = sand.u32 %s135, 1
          %s1355 = smul.addr %s1354, 4
          %s1356 = scalar_lea.vmem [#allocation9], %s1355
          %1357 = dma.done %s1353, 64
        $region64: #{tpu_custom_call.1} parent=59 // pred_fallthru
          _
      $region60: #{tpu_custom_call.1} parent=5 // pred_fallthru
        _
    $region6: #{tpu_custom_call.1} parent=1 // loop_footer
      %s22 = sadd.s32 1, %s18
    $region7: #{tpu_custom_call.1} parent=1 // loop_footer_branch
      %17 = sbr.rel target = $region3
    $region8: #{tpu_custom_call.1} parent=1 // loop_exit
      _
    %1358 = vsyncpa [#allocation4], 1
    %s1359 = scalar_lea.sflag [#allocation4], 1
    %1360 = vsyncpa %s1359, 1
    %1361 = vsyncpa [#allocation7], 1
    %s1362 = scalar_lea.sflag [#allocation7], 1
    %1363 = vsyncpa %s1362, 1
    %1364 = vsyncpa [#allocation5], 1
    %s1365 = scalar_lea.sflag [#allocation5], 1
    %1366 = vsyncpa %s1365, 1

</llo_original>
